<compile_context>
chip_gen: v7x
topology: tpu7x:2x2x1
jax: 0.10.0
libtpu: 0.0.40
codegen_flags: <defaults>
</compile_context>

<pallas_src>
import math
import jax
import jax.numpy as jnp
from jax.experimental import pallas as pl
from jax.experimental.pallas import tpu as pltpu


def _gating_kernel(xh_ref, w_ref, b_ref, x_ref, h_ref, o_ref, acc_ref):
    """Grid = (M tiles, N tiles, K tiles); K is the fused 2H reduction."""
    k = pl.program_id(2)

    @pl.when(k == 0)
    def _init():
        acc_ref[...] = jnp.zeros_like(acc_ref)

    # Native-dtype operands (bf16 stays bf16 on the MXU), f32 accumulation.
    acc_ref[...] += jnp.dot(
        xh_ref[...], w_ref[...], preferred_element_type=jnp.float32
    )

    @pl.when(k == pl.num_programs(2) - 1)
    def _finalize():
        # Bias add / sigmoid / blend happen exactly once, after the full
        # K reduction (moving them earlier would double-add the bias).
        z = acc_ref[...] + b_ref[...].astype(jnp.float32)
        g = jax.nn.sigmoid(z)
        x = x_ref[...].astype(jnp.float32)
        h = h_ref[...].astype(jnp.float32)
        o_ref[...] = (h + g * (x - h)).astype(o_ref.dtype)


def _pick_tile(dim, candidates):
    """Largest candidate that divides `dim`, else the full dim (legal block)."""
    for c in candidates:
        if dim % c == 0:
            return c
    return dim


def gating_mechanism(inputs, hiddens, weight1, weight2, bias):
    """Pallas implementation of GatingMechanism.forward.

    inputs, hiddens: [B, H]; weight1, weight2: [H, H]; bias: [H]
    """
    B, H = inputs.shape
    K = 2 * H

    # Fuse the two matmuls into one K=2H reduction:
    #   [x | h] @ concat([W1, W2], axis=0)  ==  x @ W1 + h @ W2
    xh = jnp.concatenate([inputs, hiddens], axis=1)    # [B, 2H]
    w = jnp.concatenate([weight1, weight2], axis=0)    # [2H, H]
    b2 = bias.reshape(1, H)                            # 2-D so it tiles cleanly

    # Tile selection: N prefers 256 (v6e/v7x MXU width) then 128 (v5e);
    # K prefers >= 256; batch prefers large multiples of 8.  Odd / small dims
    # fall back to the full extent (block dim == array dim is always legal).
    tm = _pick_tile(B, (512, 256, 128, 64, 32, 16, 8))
    tn = _pick_tile(H, (256, 128))
    tk = _pick_tile(K, (512, 256, 128))
    grid = (B // tm, H // tn, K // tk)

    return pl.pallas_call(
        _gating_kernel,
        out_shape=jax.ShapeDtypeStruct((B, H), inputs.dtype),
        grid_spec=pltpu.PrefetchScalarGridSpec(
            num_scalar_prefetch=0,
            grid=grid,
            in_specs=[
                pl.BlockSpec((tm, tk), lambda i, j, k: (i, k)),  # [x|h]
                pl.BlockSpec((tk, tn), lambda i, j, k: (k, j)),  # fused W
                pl.BlockSpec((1, tn), lambda i, j, k: (0, j)),   # bias
                pl.BlockSpec((tm, tn), lambda i, j, k: (i, j)),  # x (blend)
                pl.BlockSpec((tm, tn), lambda i, j, k: (i, j)),  # h (blend)
            ],
            out_specs=pl.BlockSpec((tm, tn), lambda i, j, k: (i, j)),
            scratch_shapes=[pltpu.VMEM((tm, tn), jnp.float32)],
        ),
        compiler_params=pltpu.CompilerParams(
            dimension_semantics=("parallel", "parallel", "arbitrary"),
            vmem_limit_bytes=32 * 1024 * 1024,
        ),
    )(xh, w, b2, inputs, hiddens)


def init_params(hidden_size, key, dtype=jnp.float32):
    """Deterministic init mirroring GatingMechanism.reset_parameters."""
    k1, k2, k3 = jax.random.split(key, 3)
    stdv1 = 1.0 / math.sqrt(hidden_size)
    stdv2 = 1.0 / math.sqrt(hidden_size)
    stdv = (stdv1 + stdv2) / 2.0
    w1 = jax.random.uniform(k1, (hidden_size, hidden_size), dtype,
                            minval=-stdv1, maxval=stdv1)
    w2 = jax.random.uniform(k2, (hidden_size, hidden_size), dtype,
                            minval=-stdv2, maxval=stdv2)
    b = jax.random.uniform(k3, (hidden_size,), dtype,
                           minval=-stdv, maxval=stdv)
    return w1, w2, b


def _reference(inputs, hiddens, w1, w2, b):
    g = jax.nn.sigmoid(inputs @ w1 + hiddens @ w2 + b)
    return g * inputs + (1.0 - g) * hiddens


if __name__ == "__main__":
    # --- Small demo shape consistent with the module (batch=8, hidden=32). ---
    key = jax.random.PRNGKey(0)
    k_in, k_hid, k_param = jax.random.split(key, 3)

    B, H = 8, 32
    inputs = jax.random.normal(k_in, (B, H), jnp.float32)
    hiddens = jax.random.normal(k_hid, (B, H), jnp.float32)
    w1, w2, b = init_params(H, k_param)

    out = jax.block_until_ready(gating_mechanism(inputs, hiddens, w1, w2, b))
    ref = _reference(inputs, hiddens, w1, w2, b)
    assert out.shape == (B, H)
    assert jnp.allclose(out, ref, atol=1e-3, rtol=1e-3)

    # --- Larger shape exercising the tiled / accumulating grid path ---
    # (N is tiled to 128 and K=2H is tiled to 256 => grid (1, 3, 3)).
    k_in2, k_hid2, k_param2 = jax.random.split(jax.random.PRNGKey(1), 3)
    B2, H2 = 16, 384
    inputs2 = jax.random.normal(k_in2, (B2, H2), jnp.float32)
    hiddens2 = jax.random.normal(k_hid2, (B2, H2), jnp.float32)
    w1b, w2b, bb = init_params(H2, k_param2)

    out2 = jax.block_until_ready(
        gating_mechanism(inputs2, hiddens2, w1b, w2b, bb))
    ref2 = _reference(inputs2, hiddens2, w1b, w2b, bb)
    assert out2.shape == (B2, H2)
    # Looser tolerance: kernel's tiled K accumulation order differs from XLA's.
    assert jnp.allclose(out2, ref2, atol=2e-2, rtol=2e-2)

    print("KERNEL_OK")
</pallas_src>

<mosaic_0001>
module attributes {stable_mosaic.version = 11 : i64} {
  func.func @_gating_kernel(%arg0: i32, %arg1: i32, %arg2: i32, %arg3: memref<8x64xf32, #tpu.memory_space<vmem>>, %arg4: memref<64x32xf32, #tpu.memory_space<vmem>>, %arg5: memref<1x32xf32, #tpu.memory_space<vmem>>, %arg6: memref<8x32xf32, #tpu.memory_space<vmem>>, %arg7: memref<8x32xf32, #tpu.memory_space<vmem>>, %arg8: memref<8x32xf32, #tpu.memory_space<vmem>>, %arg9: memref<8x32xf32, #tpu.memory_space<vmem>>) attributes {dimension_semantics = [#tpu.dimension_semantics<parallel>, #tpu.dimension_semantics<parallel>, #tpu.dimension_semantics<arbitrary>], iteration_bounds = array<i64: 1, 1, 1>, scalar_prefetch = 0 : i64, scratch_operands = 1 : i64, tpu.core_type = #tpu.core_type<tc>, window_params = [{transform_indices = @transform_0, window_bounds = array<i64: 8, 64>}, {transform_indices = @transform_1, window_bounds = array<i64: 64, 32>}, {transform_indices = @transform_2, window_bounds = array<i64: 1, 32>}, {transform_indices = @transform_3, window_bounds = array<i64: 8, 32>}, {transform_indices = @transform_4, window_bounds = array<i64: 8, 32>}, {transform_indices = @transform_5, window_bounds = array<i64: 8, 32>}]} {
    %c0_i32 = arith.constant 0 : i32
    %0 = arith.cmpi eq, %arg2, %c0_i32 : i32
    %1 = arith.extui %0 : i1 to i32
    %c0_i32_0 = arith.constant 0 : i32
    %2 = arith.cmpi ne, %1, %c0_i32_0 : i32
    scf.if %2 {
      %cst_10 = arith.constant 0.000000e+00 : f32
      %12 = vector.broadcast %cst_10 : f32 to vector<8x32xf32>
      %c0_11 = arith.constant 0 : index
      %c0_12 = arith.constant 0 : index
      %13 = vector.load %arg9[%c0_11, %c0_12] : memref<8x32xf32, #tpu.memory_space<vmem>>, vector<8x32xf32>
      tpu.vector_store %arg9[%c0_11, %c0_12], %12 {strides = array<i32>} : memref<8x32xf32, #tpu.memory_space<vmem>>, vector<8x32xf32>,
    } else {
    }
    %c0 = arith.constant 0 : index
    %c0_1 = arith.constant 0 : index
    %3 = vector.load %arg9[%c0, %c0_1] : memref<8x32xf32, #tpu.memory_space<vmem>>, vector<8x32xf32>
    %c0_2 = arith.constant 0 : index
    %c0_3 = arith.constant 0 : index
    %4 = vector.load %arg3[%c0_2, %c0_3] : memref<8x64xf32, #tpu.memory_space<vmem>>, vector<8x64xf32>
    %c0_4 = arith.constant 0 : index
    %c0_5 = arith.constant 0 : index
    %5 = vector.load %arg4[%c0_4, %c0_5] : memref<64x32xf32, #tpu.memory_space<vmem>>, vector<64x32xf32>
    %cst = arith.constant dense<0.000000e+00> : vector<8x32xf32>
    %6 = tpu.matmul %4, %5, %cst {dimension_numbers = #tpu.dot_dimension_numbers<[1], [0], [0], [1], [0, 0, 1, 1], [], []>} : vector<8x64xf32>, vector<64x32xf32>, vector<8x32xf32> -> vector<8x32xf32>
    %7 = arith.addf %3, %6 : vector<8x32xf32>
    %c0_6 = arith.constant 0 : index
    %c0_7 = arith.constant 0 : index
    %8 = vector.load %arg9[%c0_6, %c0_7] : memref<8x32xf32, #tpu.memory_space<vmem>>, vector<8x32xf32>
    tpu.vector_store %arg9[%c0_6, %c0_7], %7 {strides = array<i32>} : memref<8x32xf32, #tpu.memory_space<vmem>>, vector<8x32xf32>,
    %c0_i32_8 = arith.constant 0 : i32
    %9 = arith.cmpi eq, %arg2, %c0_i32_8 : i32
    %10 = arith.extui %9 : i1 to i32
    %c0_i32_9 = arith.constant 0 : i32
    %11 = arith.cmpi ne, %10, %c0_i32_9 : i32
    scf.if %11 {
      %c0_10 = arith.constant 0 : index
      %c0_11 = arith.constant 0 : index
      %12 = vector.load %arg9[%c0_10, %c0_11] : memref<8x32xf32, #tpu.memory_space<vmem>>, vector<8x32xf32>
      %c0_12 = arith.constant 0 : index
      %c0_13 = arith.constant 0 : index
      %13 = vector.load %arg5[%c0_12, %c0_13] : memref<1x32xf32, #tpu.memory_space<vmem>>, vector<1x32xf32>
      %14 = vector.broadcast %13 : vector<1x32xf32> to vector<8x32xf32>
      %15 = arith.addf %12, %14 : vector<8x32xf32>
      %16 = arith.negf %15 : vector<8x32xf32>
      %17 = math.exp %16 : vector<8x32xf32>
      %cst_14 = arith.constant 1.000000e+00 : f32
      %18 = vector.broadcast %cst_14 : f32 to vector<8x32xf32>
      %19 = arith.addf %18, %17 : vector<8x32xf32>
      %20 = arith.divf %18, %19 : vector<8x32xf32>
      %c0_15 = arith.constant 0 : index
      %c0_16 = arith.constant 0 : index
      %21 = vector.load %arg6[%c0_15, %c0_16] : memref<8x32xf32, #tpu.memory_space<vmem>>, vector<8x32xf32>
      %c0_17 = arith.constant 0 : index
      %c0_18 = arith.constant 0 : index
      %22 = vector.load %arg7[%c0_17, %c0_18] : memref<8x32xf32, #tpu.memory_space<vmem>>, vector<8x32xf32>
      %23 = arith.subf %21, %22 : vector<8x32xf32>
      %24 = arith.mulf %20, %23 : vector<8x32xf32>
      %25 = arith.addf %22, %24 : vector<8x32xf32>
      %c0_19 = arith.constant 0 : index
      %c0_20 = arith.constant 0 : index
      %26 = vector.load %arg8[%c0_19, %c0_20] : memref<8x32xf32, #tpu.memory_space<vmem>>, vector<8x32xf32>
      tpu.vector_store %arg8[%c0_19, %c0_20], %25 {strides = array<i32>} : memref<8x32xf32, #tpu.memory_space<vmem>>, vector<8x32xf32>,
    } else {
    }
    return
  }
  func.func @transform_0(%arg0: i32, %arg1: i32, %arg2: i32) -> (i32, i32) {
    %c0_i32 = arith.constant 0 : i32
    return %arg0, %arg2 : i32, i32
  }
  func.func @transform_1(%arg0: i32, %arg1: i32, %arg2: i32) -> (i32, i32) {
    %c0_i32 = arith.constant 0 : i32
    return %arg2, %arg1 : i32, i32
  }
  func.func @transform_2(%arg0: i32, %arg1: i32, %arg2: i32) -> (i32, i32) {
    %c0_i32 = arith.constant 0 : i32
    %c0_i32_0 = arith.constant 0 : i32
    return %c0_i32, %arg1 : i32, i32
  }
  func.func @transform_3(%arg0: i32, %arg1: i32, %arg2: i32) -> (i32, i32) {
    %c0_i32 = arith.constant 0 : i32
    return %arg0, %arg1 : i32, i32
  }
  func.func @transform_4(%arg0: i32, %arg1: i32, %arg2: i32) -> (i32, i32) {
    %c0_i32 = arith.constant 0 : i32
    return %arg0, %arg1 : i32, i32
  }
  func.func @transform_5(%arg0: i32, %arg1: i32, %arg2: i32) -> (i32, i32) {
    %c0_i32 = arith.constant 0 : i32
    return %arg0, %arg1 : i32, i32
  }
}

</mosaic_0001>

<llo_original>
// kernel: tpu_custom_call.1
$region0: #{tpu_custom_call.1}
  #allocation0 [shape = 'u32[]', space=smem, size = 0x4, offset = 0x4, fixed_abs, tag = 'smem constant byte address 0x4 - core index']
  #allocation1 [shape = 'u32[144,128]{1,0:T(1,128)}', space=vmem, size = 0x12000, scoped, tag = 'internal scratch']
  #allocation2 [shape = 'f32[8,32]{1,0:T(8,128)}', space=vmem, size = 0x1000, scoped, tag = 'scratch operand']
  %s0 = inlined_call_operand.vmem [shape: f32[8,64], index: 0, kind: input, shape index: {}]
  %s1 = inlined_call_operand.vmem [shape: f32[64,32], index: 1, kind: input, shape index: {}]
  %s2 = inlined_call_operand.vmem [shape: f32[1,32], index: 2, kind: input, shape index: {}]
  %s3 = inlined_call_operand.vmem [shape: f32[8,32], index: 3, kind: input, shape index: {}]
  %s4 = inlined_call_operand.vmem [shape: f32[8,32], index: 4, kind: input, shape index: {}]
  %s5 = inlined_call_operand.hbm [shape: f32[8,32], index: 5, kind: output, shape index: {}]
  %s6 = sld [smem:[#allocation0]]
  $region38: #{tpu_custom_call.1} parent=0
    _
  %s8 = ssub.s32 1, %s6
  %s9 = scalar_select 0, %s8, %s6
  $region1: #{tpu_custom_call.1} parent=0
    #allocation3 [shape = 'u8[4096]{0}', space=vmem, size = 0x1000, scoped, tag = 'output window, operand 0, single buffered']
    #allocation4 [shape = 's32[1]{0}', space=sflag, size = 0x4, scoped, tag = 'scoped memory for tpu_custom_call.1']
    %10 = vsyncpa [#allocation4], 0
    // Predicated region
    $region2: #{tpu_custom_call.1} parent=1 // pred_check
      _
    $region3: #{tpu_custom_call.1} parent=1 // pred_check_branch
      %12 = sbr.rel (0) target = $region5
    $region4: #{tpu_custom_call.1} parent=1 // pred_region
      _
    $region5: #{tpu_custom_call.1} parent=1 // pred_fallthru
      _
    // Predicated region
    $region6: #{tpu_custom_call.1} parent=1 // pred_check
      _
    $region7: #{tpu_custom_call.1} parent=1 // pred_check_branch
      %14 = sbr.rel (0) target = $region9
    $region8: #{tpu_custom_call.1} parent=1 // pred_region
      _
    $region9: #{tpu_custom_call.1} parent=1 // pred_fallthru
      _
    // Predicated region
    $region10: #{tpu_custom_call.1} parent=1 // pred_check
      _
    $region11: #{tpu_custom_call.1} parent=1 // pred_check_branch
      %16 = sbr.rel (0) target = $region13
    $region12: #{tpu_custom_call.1} parent=1 // pred_region
      _
    $region13: #{tpu_custom_call.1} parent=1 // pred_fallthru
      _
    // Predicated region
    $region14: #{tpu_custom_call.1} parent=1 // pred_check
      _
    $region15: #{tpu_custom_call.1} parent=1 // pred_check_branch
      %18 = sbr.rel (0) target = $region17
    $region16: #{tpu_custom_call.1} parent=1 // pred_region
      _
    $region17: #{tpu_custom_call.1} parent=1 // pred_fallthru
      _
    // Predicated region
    $region18: #{tpu_custom_call.1} parent=1 // pred_check
      _
    $region19: #{tpu_custom_call.1} parent=1 // pred_check_branch
      %20 = sbr.rel (0) target = $region21
    $region20: #{tpu_custom_call.1} parent=1 // pred_region
      _
    $region21: #{tpu_custom_call.1} parent=1 // pred_fallthru
      _
    %p21 = scmp.eq.s32.totalorder 0, 0
    // Predicated region
    $region22: #{tpu_custom_call.1} parent=1 // pred_check
      %p22 = pneg %p21
    $region23: #{tpu_custom_call.1} parent=1 // pred_check_branch
      %24 = sbr.rel (%p22) target = $region25
    $region24: #{tpu_custom_call.1} parent=1 // pred_region
      %vm25 = vcmask 261120
      %26 = vst.msk [vmem:[#allocation2] sm:$0xff] %vm25, 0.0
    $region25: #{tpu_custom_call.1} parent=1 // pred_fallthru
      _
    %v27 = vld [vmem:[#allocation2] sm:$0xff]
    %v28 = vld [vmem:[%s0] sm:$0xff]
    %v29 = vld [vmem:[%s1] sm:$0xff]
    %v30 = vld [vmem:[%s1 + $0x8] sm:$0xff]
    %v31 = vld [vmem:[%s1 + $0x10] sm:$0xff]
    %v32 = vld [vmem:[%s1 + $0x18] sm:$0xff]
    %v33 = vld [vmem:[%s1 + $0x20] sm:$0xff]
    %v34 = vld [vmem:[%s1 + $0x28] sm:$0xff]
    %v35 = vld [vmem:[%s1 + $0x30] sm:$0xff]
    %v36 = vld [vmem:[%s1 + $0x38] sm:$0xff]
    %vm37 = vcmask 523264
    %v39 = vsel %vm37, %v28, 0
    %41 = vmatprep.subr.mxu0 0.0
    %42 = vmatpush1.msra.mxu0 %v29
    %43 = vmatprep.subr.mxu0 0.0
    %44 = vmatpush1.msra.mxu0 %v30
    %45 = vmatprep.subr.mxu0 0.0
    %46 = vmatpush1.msra.mxu0 %v31
    %47 = vmatprep.subr.mxu0 0.0
    %48 = vmatpush1.msra.mxu0 %v32
    %49 = vmatprep.subr.mxu0 0.0
    %50 = vmatpush1.msra.mxu0 %v33
    %51 = vmatprep.subr.mxu0 0.0
    %52 = vmatpush1.msra.mxu0 %v34
    %53 = vmatprep.subr.mxu0 0.0
    %54 = vmatpush1.msra.mxu0 %v35
    %55 = vmatprep.subr.mxu0 0.0
    %56 = vmatpush1.msra.mxu0 %v36
    %57 = vmatprep.subr.mxu0 0.0
    %58 = vmatpush1.msra.mxu0 0.0
    %59 = vmatprep.subr.mxu0 0.0
    %60 = vmatpush1.msra.mxu0 0.0
    %61 = vmatprep.subr.mxu0 0.0
    %62 = vmatpush1.msra.mxu0 0.0
    %63 = vmatprep.subr.mxu0 0.0
    %64 = vmatpush1.msra.mxu0 0.0
    %65 = vmatprep.subr.mxu0 0.0
    %66 = vmatpush1.msra.mxu0 0.0
    %67 = vmatprep.subr.mxu0 0.0
    %68 = vmatpush1.msra.mxu0 0.0
    %69 = vmatprep.subr.mxu0 0.0
    %70 = vmatpush1.msra.mxu0 0.0
    %71 = vmatprep.subr.mxu0 0.0
    %72 = vmatpush1.msra.mxu0 0.0
    %73 = vmatprep.subr.mxu0 0.0
    %74 = vmatpush1.msra.mxu0 0.0
    %75 = vmatprep.subr.mxu0 0.0
    %76 = vmatpush1.msra.mxu0 0.0
    %77 = vmatprep.subr.mxu0 0.0
    %78 = vmatpush1.msra.mxu0 0.0
    %79 = vmatprep.subr.mxu0 0.0
    %80 = vmatpush1.msra.mxu0 0.0
    %81 = vmatprep.subr.mxu0 0.0
    %82 = vmatpush1.msra.mxu0 0.0
    %83 = vmatprep.subr.mxu0 0.0
    %84 = vmatpush1.msra.mxu0 0.0
    %85 = vmatprep.subr.mxu0 0.0
    %86 = vmatpush1.msra.mxu0 0.0
    %87 = vmatprep.subr.mxu0 0.0
    %88 = vmatpush1.msra.mxu0 0.0
    %89 = vmatprep.subr.mxu0 0.0
    %90 = vmatpush1.msra.mxu0 0.0
    %91 = vmatprep.subr.mxu0 0.0
    %92 = vmatpush1.msra.mxu0 0.0
    %93 = vmatprep.subr.mxu0 0.0
    %94 = vmatpush1.msra.mxu0 0.0
    %95 = vmatprep.subr.mxu0 0.0
    %96 = vmatpush1.msra.mxu0 0.0
    %97 = vmatprep.subr.mxu0 0.0
    %98 = vmatpush1.msra.mxu0 0.0
    %99 = vmatprep.subr.mxu0 0.0
    %100 = vmatpush1.msra.mxu0 0.0
    %101 = vmatprep.subr.mxu0 0.0
    %102 = vmatpush1.msra.mxu0 0.0
    %103 = vmatprep.subr.mxu0 0.0
    %104 = vmatpush1.msra.mxu0 0.0
    %105 = vmatprep.mubr.f32.mxu0 0.0
    %106 = vmatmul.mubr.f32.gmra.mrb[0].mxu0 %v39
    %v107 = vpop.f32.mrb[0].mxu0
    %v108 = vadd.f32 0.0, %v107
    %v109 = vpop.f32.mrb[0].mxu0
    %110 = vdwg.mxu0
    %v111 = vadd.f32 %v27, %v108
    %vm112 = vcmask 261120
    %113 = vst.msk [vmem:[#allocation2] sm:$0xff] %vm112, %v111
    // Predicated region
    $region26: #{tpu_custom_call.1} parent=1 // pred_check
      %p114 = pneg %p21
    $region27: #{tpu_custom_call.1} parent=1 // pred_check_branch
      %116 = sbr.rel (%p114) target = $region29
    $region28: #{tpu_custom_call.1} parent=1 // pred_region
      %v117 = vld [vmem:[#allocation2] sm:$0xff]
      %v118 = vld [vmem:[%s2] sm:$0x1]
      %v120 = vlaneseq
      %v121 = vshrl.u32 %v120, 7
      %v122 = vsub.s32 0, %v121
      %v123 = vrot.slane %v118, %v122
      %v125 = vadd.f32 %v117, %v123
      %v126 = vxor.u32 %v125, 2147483648
      %v127 = vmul.f32 %v126, 1.442695
      %v128 = vpow.pop %v127
      %v129 = vadd.f32 %v128, 1.0
      %v130 = vrcp.pop %v129
      %v131 = vmul.f32 1.0, %v130
      %v132 = vld [vmem:[%s3] sm:$0xff]
      %v133 = vld [vmem:[%s4] sm:$0xff]
      %v134 = vsub.f32 %v132, %v133
      %v135 = vmul.f32 %v131, %v134
      %v136 = vadd.f32 %v133, %v135
      %137 = vst.msk [vmem:[#allocation3] sm:$0xff] %vm112, %v136
    $region29: #{tpu_custom_call.1} parent=1 // pred_fallthru
      _
    // Predicated region
    $region30: #{tpu_custom_call.1} parent=1 // pred_check
      _
    $region31: #{tpu_custom_call.1} parent=1 // pred_check_branch
      %139 = sbr.rel (0) target = $region33
    $region32: #{tpu_custom_call.1} parent=1 // pred_region
      %s141 = ssub.s32 128, 128
      %142 = vsyncadd [#allocation4], %s141
      %s144 = sshll.u32 [#allocation3], 4
      %s145 = int_to_ptr.vmem [resolvable:$true] %s144
      %147 = dma.vmem_to_hbm [thread:$0]  %s145, 128, %s5, [#allocation4]
    $region33: #{tpu_custom_call.1} parent=1 // pred_fallthru
      _
    // Predicated region
    $region34: #{tpu_custom_call.1} parent=1 // pred_check
      _
    $region35: #{tpu_custom_call.1} parent=1 // pred_check_branch
      %149 = sbr.rel (0) target = $region37
    $region36: #{tpu_custom_call.1} parent=1 // pred_region
      %150 = dma.done [#allocation4], 128
    $region37: #{tpu_custom_call.1} parent=1 // pred_fallthru
      _
    %151 = vsyncpa [#allocation4], 1

</llo_original>
